<compile_context>
chip_gen: v7x
topology: tpu7x:2x2x1
jax: 0.10.0
libtpu: 0.0.40
codegen_flags: <defaults>
</compile_context>

<pallas_src>
import functools
import math

import jax
import jax.numpy as jnp
from jax.experimental import pallas as pl
from jax.experimental.pallas import tpu as pltpu

_VMEM_TABLE_BYTES = 4 << 20     # fast-path threshold: table held resident in VMEM
_SCOPED_VMEM_BUDGET = 32 << 20  # conservative scoped-VMEM cap (v7x: 64 MiB/core)


def _round_up(x: int, m: int) -> int:
    return ((x + m - 1) // m) * m


def _small_table_kernel(tok_smem, table_ref, out_ref, *, scale, token_block):
    """Embedding gather with the table resident in VMEM (small vocabularies)."""
    base = pl.program_id(0) * token_block
    # Per-row dynamic-slice copies straight out of the VMEM-resident table --
    # no DMA descriptors or semaphores.  token_block is compile-time, so the
    # loop is fully unrolled.
    # TODO(synk): replace with a single vectorized sublane gather
    # (jnp.take / tpu.dynamic_gather) once 1-D-index gather is reliable here.
    for t in range(token_block):
        tok = tok_smem[base + t]
        out_ref[pl.ds(t, 1), :] = table_ref[pl.ds(tok, 1), :]
    # One vectorized f32 scale over the lane-dense tile, cast on store.
    out_ref[...] = (out_ref[...].astype(jnp.float32)
                    * jnp.float32(scale)).astype(out_ref.dtype)


def _hbm_gather_kernel(tok_smem, table_hbm, out_ref, gather_buf, sem, *,
                       scale, token_block):
    """Embedding gather with the table left in HBM (large vocabularies)."""
    base = pl.program_id(0) * token_block

    # Phase 1: issue one async row DMA per token, fully unrolled.  All copies
    # share one DMA semaphore and overlap in the DMA engine.  Padded tail
    # slots gather row 0 (their ids were padded to 0), keeping the aggregate
    # wait byte-count below exact.
    for t in range(token_block):
        tok = tok_smem[base + t]
        pltpu.make_async_copy(
            table_hbm.at[pl.ds(tok, 1), :],   # (1, emb) row in HBM
            gather_buf.at[pl.ds(t, 1), :],    # (1, emb) slot in VMEM scratch
            sem.at[0],
        ).start()

    # Phase 2: single aggregate wait.  Each row copy signals `sem` with one
    # row's worth of bytes, so waiting once for the full (token_block, emb)
    # tile drains all of them.  The wait descriptor only needs the destination
    # shape + semaphore; out_ref serves as a same-shaped, non-aliasing source.
    pltpu.make_async_copy(out_ref, gather_buf, sem.at[0]).wait()

    # Phase 3: f32 scale + cast + one lane-dense store of the whole tile.
    out_ref[...] = (gather_buf[...].astype(jnp.float32)
                    * jnp.float32(scale)).astype(out_ref.dtype)


def token_embedding(tokens: jax.Array, emb_table: jax.Array, *,
                    token_block: int = 256,
                    max_vmem_table_bytes: int = _VMEM_TABLE_BYTES) -> jax.Array:
    """Returns emb_table[tokens] * sqrt(emb_size)  (PyTorch TokenEmbedding)."""
    lead_shape = tuple(tokens.shape)
    n = int(math.prod(lead_shape)) if lead_shape else 1
    vocab, emb = emb_table.shape
    itemsize = emb_table.dtype.itemsize
    table_bytes = vocab * emb * itemsize
    use_vmem_table = table_bytes <= max_vmem_table_bytes

    # ---- pick the token tile --------------------------------------------
    token_block = max(8, min(int(token_block), _round_up(n, 8)))
    if n >= 256:
        # v7x has 2 TensorCores: keep at least 2 parallel tiles when there is
        # enough work so both cores get a share of the gather.
        token_block = min(token_block, _round_up(pl.cdiv(n, 2), 8))
    token_block = _round_up(token_block, 8)

    # Clamp so every live VMEM buffer fits the scoped-VMEM budget:
    #   fast path: 2 x resident table + 2 x output tile (double-buffered)
    #   DMA  path: 1 x gather scratch  + 2 x output tile (double-buffered)
    fixed_bytes = 2 * table_bytes if use_vmem_table else 0
    bufs_per_tile = 2 if use_vmem_table else 3
    margin = 2 << 20
    while (token_block > 8 and
           fixed_bytes + bufs_per_tile * token_block * emb * itemsize + margin
           > _SCOPED_VMEM_BUDGET):
        token_block = _round_up(token_block // 2, 8)

    n_pad = pl.cdiv(n, token_block) * token_block
    tok_flat = tokens.reshape(n).astype(jnp.int32)
    if n_pad != n:
        # Padded slots look up row 0 (always valid) and are sliced off below.
        tok_flat = jnp.pad(tok_flat, (0, n_pad - n))

    scale = math.sqrt(emb)
    out_spec = pl.BlockSpec((token_block, emb), lambda i, tok: (i, 0))

    if use_vmem_table:
        kernel = functools.partial(_small_table_kernel, scale=scale,
                                   token_block=token_block)
        in_specs = [pl.BlockSpec((vocab, emb), lambda i, tok: (0, 0))]
        scratch_shapes = []
    else:
        kernel = functools.partial(_hbm_gather_kernel, scale=scale,
                                   token_block=token_block)
        in_specs = [pl.BlockSpec(memory_space=pl.ANY)]   # table stays in HBM
        scratch_shapes = [
            pltpu.VMEM((token_block, emb), emb_table.dtype),
            pltpu.SemaphoreType.DMA((1,)),
        ]

    vmem_need = fixed_bytes + bufs_per_tile * token_block * emb * itemsize + margin
    vmem_limit = int(min(max(vmem_need, 4 << 20), _SCOPED_VMEM_BUDGET))

    out_flat = pl.pallas_call(
        kernel,
        out_shape=jax.ShapeDtypeStruct((n_pad, emb), emb_table.dtype),
        grid_spec=pltpu.PrefetchScalarGridSpec(
            num_scalar_prefetch=1,                 # token ids -> SMEM
            grid=(n_pad // token_block,),
            in_specs=in_specs,
            out_specs=out_spec,
            scratch_shapes=scratch_shapes,
        ),
        compiler_params=pltpu.CompilerParams(
            dimension_semantics=("parallel",),
            vmem_limit_bytes=vmem_limit,
        ),
    )(tok_flat, emb_table)

    return out_flat[:n].reshape(lead_shape + (emb,))


def token_embedding_ref(tokens, emb_table):
    emb = emb_table.shape[1]
    return emb_table[tokens.astype(jnp.int32)] * math.sqrt(emb)


if __name__ == "__main__":
    key = jax.random.PRNGKey(0)
    k_emb, k_tok = jax.random.split(key)

    vocab_size, emb_size = 64, 128
    batch, seq = 2, 8

    # nn.Embedding default init: weight ~ N(0, 1)
    emb_table = jax.random.normal(k_emb, (vocab_size, emb_size), dtype=jnp.float32)
    tokens = jax.random.randint(k_tok, (batch, seq), 0, vocab_size, dtype=jnp.int32)

    ref = token_embedding_ref(tokens, emb_table)

    # Path 1 (default at this size): small table -> VMEM-resident fast path.
    out_fast = token_embedding(tokens, emb_table)
    jax.block_until_ready(out_fast)
    assert out_fast.shape == (batch, seq, emb_size)
    assert jnp.allclose(out_fast, ref, atol=1e-5, rtol=1e-5), "fast path mismatch"

    # Path 2: force the HBM DMA row-gather path (what large vocabularies use).
    out_dma = token_embedding(tokens, emb_table, max_vmem_table_bytes=0)
    jax.block_until_ready(out_dma)
    assert out_dma.shape == (batch, seq, emb_size)
    assert jnp.allclose(out_dma, ref, atol=1e-5, rtol=1e-5), "DMA path mismatch"

    print("KERNEL_OK")
</pallas_src>

<mosaic_0001>
module attributes {stable_mosaic.version = 11 : i64} {
  func.func @_small_table_kernel(%arg0: i32, %arg1: memref<16xi32, #tpu.memory_space<smem>>, %arg2: memref<64x128xf32, #tpu.memory_space<vmem>>, %arg3: memref<16x128xf32, #tpu.memory_space<vmem>>) attributes {dimension_semantics = [#tpu.dimension_semantics<parallel>], iteration_bounds = array<i64: 1>, scalar_prefetch = 1 : i64, scratch_operands = 0 : i64, tpu.core_type = #tpu.core_type<tc>, window_params = [{pipeline_mode = #tpu.pipeline_mode<synchronous>, transform_indices = @transform_0, window_bounds = array<i64: 64, 128>}, {transform_indices = @transform_1, window_bounds = array<i64: 16, 128>}]} {
    %c16_i32 = arith.constant 16 : i32
    %0 = arith.muli %arg0, %c16_i32 : i32
    %c0_i32 = arith.constant 0 : i32
    %1 = arith.addi %0, %c0_i32 : i32
    %2 = arith.index_cast %1 : i32 to index
    %3 = memref.load %arg1[%2] : memref<16xi32, #tpu.memory_space<smem>>
    %4 = arith.index_cast %3 : i32 to index
    %c0 = arith.constant 0 : index
    %5 = vector.load %arg2[%4, %c0] : memref<64x128xf32, #tpu.memory_space<vmem>>, vector<1x128xf32>
    %c0_0 = arith.constant 0 : index
    %c0_1 = arith.constant 0 : index
    %6 = vector.load %arg3[%c0_0, %c0_1] : memref<16x128xf32, #tpu.memory_space<vmem>>, vector<1x128xf32>
    tpu.vector_store %arg3[%c0_0, %c0_1], %5 {strides = array<i32>} : memref<16x128xf32, #tpu.memory_space<vmem>>, vector<1x128xf32>,
    %c1_i32 = arith.constant 1 : i32
    %7 = arith.addi %0, %c1_i32 : i32
    %8 = arith.index_cast %7 : i32 to index
    %9 = memref.load %arg1[%8] : memref<16xi32, #tpu.memory_space<smem>>
    %10 = arith.index_cast %9 : i32 to index
    %c0_2 = arith.constant 0 : index
    %11 = vector.load %arg2[%10, %c0_2] : memref<64x128xf32, #tpu.memory_space<vmem>>, vector<1x128xf32>
    %c1 = arith.constant 1 : index
    %c0_3 = arith.constant 0 : index
    %12 = vector.load %arg3[%c1, %c0_3] : memref<16x128xf32, #tpu.memory_space<vmem>>, vector<1x128xf32>
    tpu.vector_store %arg3[%c1, %c0_3], %11 {strides = array<i32>} : memref<16x128xf32, #tpu.memory_space<vmem>>, vector<1x128xf32>,
    %c2_i32 = arith.constant 2 : i32
    %13 = arith.addi %0, %c2_i32 : i32
    %14 = arith.index_cast %13 : i32 to index
    %15 = memref.load %arg1[%14] : memref<16xi32, #tpu.memory_space<smem>>
    %16 = arith.index_cast %15 : i32 to index
    %c0_4 = arith.constant 0 : index
    %17 = vector.load %arg2[%16, %c0_4] : memref<64x128xf32, #tpu.memory_space<vmem>>, vector<1x128xf32>
    %c2 = arith.constant 2 : index
    %c0_5 = arith.constant 0 : index
    %18 = vector.load %arg3[%c2, %c0_5] : memref<16x128xf32, #tpu.memory_space<vmem>>, vector<1x128xf32>
    tpu.vector_store %arg3[%c2, %c0_5], %17 {strides = array<i32>} : memref<16x128xf32, #tpu.memory_space<vmem>>, vector<1x128xf32>,
    %c3_i32 = arith.constant 3 : i32
    %19 = arith.addi %0, %c3_i32 : i32
    %20 = arith.index_cast %19 : i32 to index
    %21 = memref.load %arg1[%20] : memref<16xi32, #tpu.memory_space<smem>>
    %22 = arith.index_cast %21 : i32 to index
    %c0_6 = arith.constant 0 : index
    %23 = vector.load %arg2[%22, %c0_6] : memref<64x128xf32, #tpu.memory_space<vmem>>, vector<1x128xf32>
    %c3 = arith.constant 3 : index
    %c0_7 = arith.constant 0 : index
    %24 = vector.load %arg3[%c3, %c0_7] : memref<16x128xf32, #tpu.memory_space<vmem>>, vector<1x128xf32>
    tpu.vector_store %arg3[%c3, %c0_7], %23 {strides = array<i32>} : memref<16x128xf32, #tpu.memory_space<vmem>>, vector<1x128xf32>,
    %c4_i32 = arith.constant 4 : i32
    %25 = arith.addi %0, %c4_i32 : i32
    %26 = arith.index_cast %25 : i32 to index
    %27 = memref.load %arg1[%26] : memref<16xi32, #tpu.memory_space<smem>>
    %28 = arith.index_cast %27 : i32 to index
    %c0_8 = arith.constant 0 : index
    %29 = vector.load %arg2[%28, %c0_8] : memref<64x128xf32, #tpu.memory_space<vmem>>, vector<1x128xf32>
    %c4 = arith.constant 4 : index
    %c0_9 = arith.constant 0 : index
    %30 = vector.load %arg3[%c4, %c0_9] : memref<16x128xf32, #tpu.memory_space<vmem>>, vector<1x128xf32>
    tpu.vector_store %arg3[%c4, %c0_9], %29 {strides = array<i32>} : memref<16x128xf32, #tpu.memory_space<vmem>>, vector<1x128xf32>,
    %c5_i32 = arith.constant 5 : i32
    %31 = arith.addi %0, %c5_i32 : i32
    %32 = arith.index_cast %31 : i32 to index
    %33 = memref.load %arg1[%32] : memref<16xi32, #tpu.memory_space<smem>>
    %34 = arith.index_cast %33 : i32 to index
    %c0_10 = arith.constant 0 : index
    %35 = vector.load %arg2[%34, %c0_10] : memref<64x128xf32, #tpu.memory_space<vmem>>, vector<1x128xf32>
    %c5 = arith.constant 5 : index
    %c0_11 = arith.constant 0 : index
    %36 = vector.load %arg3[%c5, %c0_11] : memref<16x128xf32, #tpu.memory_space<vmem>>, vector<1x128xf32>
    tpu.vector_store %arg3[%c5, %c0_11], %35 {strides = array<i32>} : memref<16x128xf32, #tpu.memory_space<vmem>>, vector<1x128xf32>,
    %c6_i32 = arith.constant 6 : i32
    %37 = arith.addi %0, %c6_i32 : i32
    %38 = arith.index_cast %37 : i32 to index
    %39 = memref.load %arg1[%38] : memref<16xi32, #tpu.memory_space<smem>>
    %40 = arith.index_cast %39 : i32 to index
    %c0_12 = arith.constant 0 : index
    %41 = vector.load %arg2[%40, %c0_12] : memref<64x128xf32, #tpu.memory_space<vmem>>, vector<1x128xf32>
    %c6 = arith.constant 6 : index
    %c0_13 = arith.constant 0 : index
    %42 = vector.load %arg3[%c6, %c0_13] : memref<16x128xf32, #tpu.memory_space<vmem>>, vector<1x128xf32>
    tpu.vector_store %arg3[%c6, %c0_13], %41 {strides = array<i32>} : memref<16x128xf32, #tpu.memory_space<vmem>>, vector<1x128xf32>,
    %c7_i32 = arith.constant 7 : i32
    %43 = arith.addi %0, %c7_i32 : i32
    %44 = arith.index_cast %43 : i32 to index
    %45 = memref.load %arg1[%44] : memref<16xi32, #tpu.memory_space<smem>>
    %46 = arith.index_cast %45 : i32 to index
    %c0_14 = arith.constant 0 : index
    %47 = vector.load %arg2[%46, %c0_14] : memref<64x128xf32, #tpu.memory_space<vmem>>, vector<1x128xf32>
    %c7 = arith.constant 7 : index
    %c0_15 = arith.constant 0 : index
    %48 = vector.load %arg3[%c7, %c0_15] : memref<16x128xf32, #tpu.memory_space<vmem>>, vector<1x128xf32>
    tpu.vector_store %arg3[%c7, %c0_15], %47 {strides = array<i32>} : memref<16x128xf32, #tpu.memory_space<vmem>>, vector<1x128xf32>,
    %c8_i32 = arith.constant 8 : i32
    %49 = arith.addi %0, %c8_i32 : i32
    %50 = arith.index_cast %49 : i32 to index
    %51 = memref.load %arg1[%50] : memref<16xi32, #tpu.memory_space<smem>>
    %52 = arith.index_cast %51 : i32 to index
    %c0_16 = arith.constant 0 : index
    %53 = vector.load %arg2[%52, %c0_16] : memref<64x128xf32, #tpu.memory_space<vmem>>, vector<1x128xf32>
    %c8 = arith.constant 8 : index
    %c0_17 = arith.constant 0 : index
    %54 = vector.load %arg3[%c8, %c0_17] : memref<16x128xf32, #tpu.memory_space<vmem>>, vector<1x128xf32>
    tpu.vector_store %arg3[%c8, %c0_17], %53 {strides = array<i32>} : memref<16x128xf32, #tpu.memory_space<vmem>>, vector<1x128xf32>,
    %c9_i32 = arith.constant 9 : i32
    %55 = arith.addi %0, %c9_i32 : i32
    %56 = arith.index_cast %55 : i32 to index
    %57 = memref.load %arg1[%56] : memref<16xi32, #tpu.memory_space<smem>>
    %58 = arith.index_cast %57 : i32 to index
    %c0_18 = arith.constant 0 : index
    %59 = vector.load %arg2[%58, %c0_18] : memref<64x128xf32, #tpu.memory_space<vmem>>, vector<1x128xf32>
    %c9 = arith.constant 9 : index
    %c0_19 = arith.constant 0 : index
    %60 = vector.load %arg3[%c9, %c0_19] : memref<16x128xf32, #tpu.memory_space<vmem>>, vector<1x128xf32>
    tpu.vector_store %arg3[%c9, %c0_19], %59 {strides = array<i32>} : memref<16x128xf32, #tpu.memory_space<vmem>>, vector<1x128xf32>,
    %c10_i32 = arith.constant 10 : i32
    %61 = arith.addi %0, %c10_i32 : i32
    %62 = arith.index_cast %61 : i32 to index
    %63 = memref.load %arg1[%62] : memref<16xi32, #tpu.memory_space<smem>>
    %64 = arith.index_cast %63 : i32 to index
    %c0_20 = arith.constant 0 : index
    %65 = vector.load %arg2[%64, %c0_20] : memref<64x128xf32, #tpu.memory_space<vmem>>, vector<1x128xf32>
    %c10 = arith.constant 10 : index
    %c0_21 = arith.constant 0 : index
    %66 = vector.load %arg3[%c10, %c0_21] : memref<16x128xf32, #tpu.memory_space<vmem>>, vector<1x128xf32>
    tpu.vector_store %arg3[%c10, %c0_21], %65 {strides = array<i32>} : memref<16x128xf32, #tpu.memory_space<vmem>>, vector<1x128xf32>,
    %c11_i32 = arith.constant 11 : i32
    %67 = arith.addi %0, %c11_i32 : i32
    %68 = arith.index_cast %67 : i32 to index
    %69 = memref.load %arg1[%68] : memref<16xi32, #tpu.memory_space<smem>>
    %70 = arith.index_cast %69 : i32 to index
    %c0_22 = arith.constant 0 : index
    %71 = vector.load %arg2[%70, %c0_22] : memref<64x128xf32, #tpu.memory_space<vmem>>, vector<1x128xf32>
    %c11 = arith.constant 11 : index
    %c0_23 = arith.constant 0 : index
    %72 = vector.load %arg3[%c11, %c0_23] : memref<16x128xf32, #tpu.memory_space<vmem>>, vector<1x128xf32>
    tpu.vector_store %arg3[%c11, %c0_23], %71 {strides = array<i32>} : memref<16x128xf32, #tpu.memory_space<vmem>>, vector<1x128xf32>,
    %c12_i32 = arith.constant 12 : i32
    %73 = arith.addi %0, %c12_i32 : i32
    %74 = arith.index_cast %73 : i32 to index
    %75 = memref.load %arg1[%74] : memref<16xi32, #tpu.memory_space<smem>>
    %76 = arith.index_cast %75 : i32 to index
    %c0_24 = arith.constant 0 : index
    %77 = vector.load %arg2[%76, %c0_24] : memref<64x128xf32, #tpu.memory_space<vmem>>, vector<1x128xf32>
    %c12 = arith.constant 12 : index
    %c0_25 = arith.constant 0 : index
    %78 = vector.load %arg3[%c12, %c0_25] : memref<16x128xf32, #tpu.memory_space<vmem>>, vector<1x128xf32>
    tpu.vector_store %arg3[%c12, %c0_25], %77 {strides = array<i32>} : memref<16x128xf32, #tpu.memory_space<vmem>>, vector<1x128xf32>,
    %c13_i32 = arith.constant 13 : i32
    %79 = arith.addi %0, %c13_i32 : i32
    %80 = arith.index_cast %79 : i32 to index
    %81 = memref.load %arg1[%80] : memref<16xi32, #tpu.memory_space<smem>>
    %82 = arith.index_cast %81 : i32 to index
    %c0_26 = arith.constant 0 : index
    %83 = vector.load %arg2[%82, %c0_26] : memref<64x128xf32, #tpu.memory_space<vmem>>, vector<1x128xf32>
    %c13 = arith.constant 13 : index
    %c0_27 = arith.constant 0 : index
    %84 = vector.load %arg3[%c13, %c0_27] : memref<16x128xf32, #tpu.memory_space<vmem>>, vector<1x128xf32>
    tpu.vector_store %arg3[%c13, %c0_27], %83 {strides = array<i32>} : memref<16x128xf32, #tpu.memory_space<vmem>>, vector<1x128xf32>,
    %c14_i32 = arith.constant 14 : i32
    %85 = arith.addi %0, %c14_i32 : i32
    %86 = arith.index_cast %85 : i32 to index
    %87 = memref.load %arg1[%86] : memref<16xi32, #tpu.memory_space<smem>>
    %88 = arith.index_cast %87 : i32 to index
    %c0_28 = arith.constant 0 : index
    %89 = vector.load %arg2[%88, %c0_28] : memref<64x128xf32, #tpu.memory_space<vmem>>, vector<1x128xf32>
    %c14 = arith.constant 14 : index
    %c0_29 = arith.constant 0 : index
    %90 = vector.load %arg3[%c14, %c0_29] : memref<16x128xf32, #tpu.memory_space<vmem>>, vector<1x128xf32>
    tpu.vector_store %arg3[%c14, %c0_29], %89 {strides = array<i32>} : memref<16x128xf32, #tpu.memory_space<vmem>>, vector<1x128xf32>,
    %c15_i32 = arith.constant 15 : i32
    %91 = arith.addi %0, %c15_i32 : i32
    %92 = arith.index_cast %91 : i32 to index
    %93 = memref.load %arg1[%92] : memref<16xi32, #tpu.memory_space<smem>>
    %94 = arith.index_cast %93 : i32 to index
    %c0_30 = arith.constant 0 : index
    %95 = vector.load %arg2[%94, %c0_30] : memref<64x128xf32, #tpu.memory_space<vmem>>, vector<1x128xf32>
    %c15 = arith.constant 15 : index
    %c0_31 = arith.constant 0 : index
    %96 = vector.load %arg3[%c15, %c0_31] : memref<16x128xf32, #tpu.memory_space<vmem>>, vector<1x128xf32>
    tpu.vector_store %arg3[%c15, %c0_31], %95 {strides = array<i32>} : memref<16x128xf32, #tpu.memory_space<vmem>>, vector<1x128xf32>,
    %c0_32 = arith.constant 0 : index
    %c0_33 = arith.constant 0 : index
    %97 = vector.load %arg3[%c0_32, %c0_33] : memref<16x128xf32, #tpu.memory_space<vmem>>, vector<16x128xf32>
    %cst = arith.constant 11.3137083 : f32
    %98 = vector.broadcast %cst : f32 to vector<16x128xf32>
    %99 = arith.mulf %97, %98 : vector<16x128xf32>
    %c0_34 = arith.constant 0 : index
    %c0_35 = arith.constant 0 : index
    %100 = vector.load %arg3[%c0_34, %c0_35] : memref<16x128xf32, #tpu.memory_space<vmem>>, vector<16x128xf32>
    tpu.vector_store %arg3[%c0_34, %c0_35], %99 {strides = array<i32>} : memref<16x128xf32, #tpu.memory_space<vmem>>, vector<16x128xf32>,
    return
  }
  func.func @transform_0(%arg0: i32, %arg1: memref<16xi32, #tpu.memory_space<smem>>) -> (i32, i32) {
    %c0_i32 = arith.constant 0 : i32
    %c0_i32_0 = arith.constant 0 : i32
    %c0_i32_1 = arith.constant 0 : i32
    return %c0_i32, %c0_i32_0 : i32, i32
  }
  func.func @transform_1(%arg0: i32, %arg1: memref<16xi32, #tpu.memory_space<smem>>) -> (i32, i32) {
    %c0_i32 = arith.constant 0 : i32
    %c0_i32_0 = arith.constant 0 : i32
    return %arg0, %c0_i32 : i32, i32
  }
}

</mosaic_0001>

<llo_original>
// kernel: tpu_custom_call.1
$region0: #{tpu_custom_call.1}
  #allocation0 [shape = 'u32[]', space=smem, size = 0x4, offset = 0x4, fixed_abs, tag = 'smem constant byte address 0x4 - core index']
  #allocation1 [shape = 'u32[144,128]{1,0:T(1,128)}', space=vmem, size = 0x12000, scoped, tag = 'internal scratch']
  #allocation2 [shape = 's32[1]{0}', space=sflag, size = 0x4, scoped, tag = 'scoped memory for tpu_custom_call.1']
  #allocation3 [shape = 'u8[512]{0}', space=smem, size = 0x200, scoped, tag = 'prefetched SMEM operand 0']
  %s0 = inlined_call_operand.hbm [shape: s32[16], index: 0, kind: input, shape index: {}]
  %s1 = inlined_call_operand.hbm [shape: f32[64,128], index: 1, kind: input, shape index: {}]
  %s2 = inlined_call_operand.hbm [shape: f32[16,128], index: 2, kind: output, shape index: {}]
  %s3 = sld [smem:[#allocation0]]
  $region18: #{tpu_custom_call.1} parent=0
    _
  %s5 = ssub.s32 1, %s3
  %s6 = scalar_select 0, %s5, %s3
  %8 = dma.hbm_to_smem %s0, 16, [#allocation3], [#allocation2]
  %9 = dma.done [#allocation2], 16
  %10 = sfence
  $region1: #{tpu_custom_call.1} parent=0
    #allocation4 [shape = 'u8[32768]{0}', space=vmem, size = 0x8000, scoped, tag = 'input window, operand 1, single buffered']
    #allocation5 [shape = 's32[1]{0}', space=sflag, size = 0x4, scoped, tag = 'scoped memory for tpu_custom_call.1']
    #allocation6 [shape = 's32[1]{0}', space=sflag, size = 0x4, scoped, tag = 'scoped memory for tpu_custom_call.1']
    #allocation7 [shape = 'u8[8192]{0}', space=vmem, size = 0x2000, scoped, tag = 'output window, operand 0, single buffered']
    %11 = vsyncpa [#allocation5], 0
    %12 = vsyncpa [#allocation6], 0
    // Predicated region
    $region2: #{tpu_custom_call.1} parent=1 // pred_check
      _
    $region3: #{tpu_custom_call.1} parent=1 // pred_check_branch
      %14 = sbr.rel (0) target = $region5
    $region4: #{tpu_custom_call.1} parent=1 // pred_region
      %s16 = ssub.s32 1024, 1024
      %17 = vsyncadd [#allocation5], %s16
      %s18 = sshll.u32 [#allocation4], 4
      %s19 = int_to_ptr.vmem [resolvable:$true] %s18
      %24 = dma.hbm_to_vmem [thread:$0]  %s1, 1024, %s19, [#allocation5], 128, 128, 8
    $region5: #{tpu_custom_call.1} parent=1 // pred_fallthru
      _
    // Predicated region
    $region6: #{tpu_custom_call.1} parent=1 // pred_check
      _
    $region7: #{tpu_custom_call.1} parent=1 // pred_check_branch
      %26 = sbr.rel (0) target = $region9
    $region8: #{tpu_custom_call.1} parent=1 // pred_region
      %27 = dma.done [#allocation5], 1024
    $region9: #{tpu_custom_call.1} parent=1 // pred_fallthru
      _
    %s28 = smul.u32 0, 16
    %s29 = sld [smem:[#allocation3 + %s28]]
    %s30 = scalar_lea.vmem [#allocation4], %s29
    %v31 = vld [vmem:[%s30] sm:$0x1]
    %32 = vst [vmem:[#allocation7] sm:$0x1] %v31
    %s33 = sadd.s32 %s28, 1
    %s34 = sld [smem:[#allocation3 + %s33]]
    %s35 = scalar_lea.vmem [#allocation4], %s34
    %v36 = vld [vmem:[%s35] sm:$0x1]
    %37 = vst [vmem:[#allocation7 + $0x1] sm:$0x1] %v36
    %s38 = sadd.s32 %s28, 2
    %s39 = sld [smem:[#allocation3 + %s38]]
    %s40 = scalar_lea.vmem [#allocation4], %s39
    %v41 = vld [vmem:[%s40] sm:$0x1]
    %42 = vst [vmem:[#allocation7 + $0x2] sm:$0x1] %v41
    %s43 = sadd.s32 %s28, 3
    %s44 = sld [smem:[#allocation3 + %s43]]
    %s45 = scalar_lea.vmem [#allocation4], %s44
    %v46 = vld [vmem:[%s45] sm:$0x1]
    %47 = vst [vmem:[#allocation7 + $0x3] sm:$0x1] %v46
    %s48 = sadd.s32 %s28, 4
    %s49 = sld [smem:[#allocation3 + %s48]]
    %s50 = scalar_lea.vmem [#allocation4], %s49
    %v51 = vld [vmem:[%s50] sm:$0x1]
    %52 = vst [vmem:[#allocation7 + $0x4] sm:$0x1] %v51
    %s53 = sadd.s32 %s28, 5
    %s54 = sld [smem:[#allocation3 + %s53]]
    %s55 = scalar_lea.vmem [#allocation4], %s54
    %v56 = vld [vmem:[%s55] sm:$0x1]
    %57 = vst [vmem:[#allocation7 + $0x5] sm:$0x1] %v56
    %s58 = sadd.s32 %s28, 6
    %s59 = sld [smem:[#allocation3 + %s58]]
    %s60 = scalar_lea.vmem [#allocation4], %s59
    %v61 = vld [vmem:[%s60] sm:$0x1]
    %62 = vst [vmem:[#allocation7 + $0x6] sm:$0x1] %v61
    %s63 = sadd.s32 %s28, 7
    %s64 = sld [smem:[#allocation3 + %s63]]
    %s65 = scalar_lea.vmem [#allocation4], %s64
    %v66 = vld [vmem:[%s65] sm:$0x1]
    %67 = vst [vmem:[#allocation7 + $0x7] sm:$0x1] %v66
    %s68 = sadd.s32 %s28, 8
    %s69 = sld [smem:[#allocation3 + %s68]]
    %s70 = scalar_lea.vmem [#allocation4], %s69
    %v71 = vld [vmem:[%s70] sm:$0x1]
    %72 = vst [vmem:[#allocation7 + $0x8] sm:$0x1] %v71
    %s73 = sadd.s32 %s28, 9
    %s74 = sld [smem:[#allocation3 + %s73]]
    %s75 = scalar_lea.vmem [#allocation4], %s74
    %v76 = vld [vmem:[%s75] sm:$0x1]
    %77 = vst [vmem:[#allocation7 + $0x9] sm:$0x1] %v76
    %s78 = sadd.s32 %s28, 10
    %s79 = sld [smem:[#allocation3 + %s78]]
    %s80 = scalar_lea.vmem [#allocation4], %s79
    %v81 = vld [vmem:[%s80] sm:$0x1]
    %82 = vst [vmem:[#allocation7 + $0xa] sm:$0x1] %v81
    %s83 = sadd.s32 %s28, 11
    %s84 = sld [smem:[#allocation3 + %s83]]
    %s85 = scalar_lea.vmem [#allocation4], %s84
    %v86 = vld [vmem:[%s85] sm:$0x1]
    %87 = vst [vmem:[#allocation7 + $0xb] sm:$0x1] %v86
    %s88 = sadd.s32 %s28, 12
    %s89 = sld [smem:[#allocation3 + %s88]]
    %s90 = scalar_lea.vmem [#allocation4], %s89
    %v91 = vld [vmem:[%s90] sm:$0x1]
    %92 = vst [vmem:[#allocation7 + $0xc] sm:$0x1] %v91
    %s93 = sadd.s32 %s28, 13
    %s94 = sld [smem:[#allocation3 + %s93]]
    %s95 = scalar_lea.vmem [#allocation4], %s94
    %v96 = vld [vmem:[%s95] sm:$0x1]
    %97 = vst [vmem:[#allocation7 + $0xd] sm:$0x1] %v96
    %s98 = sadd.s32 %s28, 14
    %s99 = sld [smem:[#allocation3 + %s98]]
    %s100 = scalar_lea.vmem [#allocation4], %s99
    %v101 = vld [vmem:[%s100] sm:$0x1]
    %102 = vst [vmem:[#allocation7 + $0xe] sm:$0x1] %v101
    %s103 = sadd.s32 %s28, 15
    %s104 = sld [smem:[#allocation3 + %s103]]
    %s105 = scalar_lea.vmem [#allocation4], %s104
    %v106 = vld [vmem:[%s105] sm:$0x1]
    %107 = vst [vmem:[#allocation7 + $0xf] sm:$0x1] %v106
    %v108 = vld [vmem:[#allocation7] sm:$0xff]
    %v109 = vld [vmem:[#allocation7 + $0x8] sm:$0xff]
    %v110 = vmul.f32 %v108, 11.313708
    %v111 = vmul.f32 %v109, 11.313708
    %112 = vst [vmem:[#allocation7] sm:$0xff] %v110
    %113 = vst [vmem:[#allocation7 + $0x8] sm:$0xff] %v111
    // Predicated region
    $region10: #{tpu_custom_call.1} parent=1 // pred_check
      _
    $region11: #{tpu_custom_call.1} parent=1 // pred_check_branch
      %115 = sbr.rel (0) target = $region13
    $region12: #{tpu_custom_call.1} parent=1 // pred_region
      %s117 = ssub.s32 256, 256
      %118 = vsyncadd [#allocation6], %s117
      %s119 = sshll.u32 [#allocation7], 4
      %s120 = int_to_ptr.vmem [resolvable:$true] %s119
      %125 = dma.vmem_to_hbm [thread:$0]  %s120, 256, %s2, [#allocation6], 128, 128, 8
    $region13: #{tpu_custom_call.1} parent=1 // pred_fallthru
      _
    // Predicated region
    $region14: #{tpu_custom_call.1} parent=1 // pred_check
      _
    $region15: #{tpu_custom_call.1} parent=1 // pred_check_branch
      %127 = sbr.rel (0) target = $region17
    $region16: #{tpu_custom_call.1} parent=1 // pred_region
      %128 = dma.done [#allocation6], 256
    $region17: #{tpu_custom_call.1} parent=1 // pred_fallthru
      _
    %129 = vsyncpa [#allocation5], 1
    %130 = vsyncpa [#allocation6], 1

</llo_original>
